<compile_context>
chip_gen: v7x
topology: tpu7x:2x2x1
jax: 0.10.0
libtpu: 0.0.40
codegen_flags: <defaults>
</compile_context>

<pallas_src>
import math

import jax
import jax.numpy as jnp
from jax.experimental import pallas as pl
from jax.experimental.pallas import tpu as pltpu

NUM_HEADS = 4


def _make_kernel(TB, S):
    """Kernel over one batch block of TB sequences (x flattened to [TB*S, E])."""

    def kernel(x_ref, mask_ref, a_ref, c_ref, wstack_ref, bop_ref,
               wc1_ref, bc1_ref, wc2_ref, bc2_ref, logits_ref):
        E = x_ref.shape[1]
        H = a_ref.shape[1]
        cd = wstack_ref.dtype                       # compute dtype for MXU matmuls

        x = x_ref[...]                              # [TB*S, E]  (compute dtype)

        # ---- attention scores: K projection folded into A ([E, H]) -------------
        scores = jnp.dot(x, a_ref[...], preferred_element_type=jnp.float32)
        scores = (scores + c_ref[...]).reshape(TB, S, H) + mask_ref[...]   # + [TB,S,1] f32 mask

        # ---- masked softmax over the sequence axis (f32 throughout) ------------
        m = jnp.max(scores, axis=1, keepdims=True)                  # [TB, 1, H]
        e = jnp.exp(scores - m)
        p = e / jnp.sum(e, axis=1, keepdims=True)                   # [TB, S, H] f32

        # ---- pool over S BEFORE any projection, then apply the folded per-head
        #      projection Wstack_h = Wv_h @ Wo^T @ Wp^T  (no x@Wv matmul) ---------
        xf = x.astype(jnp.float32).reshape(TB, S, E)                # [TB, S, E] f32
        pooled = bop_ref[...]                                       # [1, d_out] f32 (broadcasts)
        for h in range(H):
            u_h = jnp.sum(p[:, :, h:h + 1] * xf, axis=1)            # [TB, E] f32 (VPU)
            pooled = pooled + jnp.dot(u_h.astype(cd),
                                      wstack_ref[h * E:(h + 1) * E, :],
                                      preferred_element_type=jnp.float32)

        # ---- classifier MLP ------------------------------------------------------
        hid = jnp.maximum(
            jnp.dot(pooled.astype(cd), wc1_ref[...],
                    preferred_element_type=jnp.float32) + bc1_ref[...], 0.0)   # [TB, hidden]
        logits = jnp.dot(hid.astype(cd), wc2_ref[...],
                         preferred_element_type=jnp.float32) + bc2_ref[...]    # [TB, C_pad]
        logits_ref[...] = logits[None].astype(logits_ref.dtype)                # [1, TB, C_pad]

    return kernel


def classif_reg_mhap_forward(embeddings, attention_mask, params,
                             num_heads=NUM_HEADS, block_batch=None,
                             compute_dtype=jnp.bfloat16,
                             vmem_limit_bytes=48 * 1024 * 1024):
    """Mirrors CLASSIF_REG_MHAP.forward(embeddings, attention_mask) -> {'logits': ...}."""
    B, S, E = embeddings.shape
    assert E % num_heads == 0
    H = num_heads
    dh = E // H
    scale = 1.0 / math.sqrt(dh)
    d_out = params['wp'].shape[0]
    hidden = params['wc1'].shape[0]
    num_classes = params['wc2'].shape[0]
    f32 = jnp.float32
    itemsize = jnp.dtype(compute_dtype).itemsize

    # ---- batch block: >=2 grid steps when possible (pipelining + megacore), small
    #      x block, TB*S sublane-aligned (or TB == B). -------------------------------
    if block_batch is None:
        cands = [d for d in range(1, B + 1)
                 if B % d == 0 and ((d * S) % 8 == 0 or d == B)]
        good = [d for d in cands
                if (B // d) >= 2 and d * S * E * itemsize <= (8 << 20)]
        TB = max(good) if good else min(cands)
    else:
        TB = block_batch
    assert B % TB == 0, "block_batch must divide batch size"
    assert (TB * S) % 8 == 0 or TB == B, "need TB*S % 8 == 0 (sublane tile) or TB == B"
    G = B // TB

    # ---- batch-invariant algebra (plain JAX, once at trace time) --------------------
    Q = params['query'] @ params['wq'].T + params['bq']             # [1, E]
    Qh = Q.reshape(H, dh)
    Wk_h = params['wk'].reshape(H, dh, E)
    A = scale * jnp.einsum('hd,hde->eh', Qh, Wk_h)                  # [E, H]
    c = (scale * jnp.einsum('hd,hd->h', Qh,
                            params['bk'].reshape(H, dh))).reshape(1, H)

    Wo_t = params['wo'].T                                           # [E, E]
    Wp_t = params['wp'].T                                           # [E, d_out]
    W_op = Wo_t @ Wp_t                                              # Wo folded into Wp
    Wv_t = params['wv'].T                                           # [E, E]
    # per-head Wv folded through the (already folded) out/pool projection:
    Wstack = jnp.concatenate(
        [Wv_t[:, h * dh:(h + 1) * dh] @ W_op[h * dh:(h + 1) * dh, :] for h in range(H)],
        axis=0)                                                     # [H*E, d_out]
    # softmax weights sum to 1 -> V bias contributes exactly bv @ W_op:
    b_op = params['bv'] @ W_op + params['bo'] @ Wp_t + params['bp']  # [1, d_out]

    Wc1_t = params['wc1'].T                                         # [d_out, hidden]
    C_pad = ((num_classes + 127) // 128) * 128                      # lane-dense logits store
    Wc2_pad = jnp.zeros((hidden, C_pad), f32).at[:, :num_classes].set(params['wc2'].T)
    bc2_pad = jnp.zeros((1, C_pad), f32).at[:, :num_classes].set(params['bc2'])

    consts = [
        A.astype(compute_dtype), c.astype(f32),
        Wstack.astype(compute_dtype), b_op.astype(f32),
        Wc1_t.astype(compute_dtype), params['bc1'].astype(f32),
        Wc2_pad.astype(compute_dtype), bc2_pad.astype(f32),
    ]

    # ---- streamed per-block inputs ---------------------------------------------------
    x2 = embeddings.reshape(B * S, E).astype(compute_dtype)          # bf16 halves HBM bytes
    # additive key-padding mask; MUST stay float32 (-1e30 in bf16 becomes -inf -> NaN).
    addmask = jnp.where(attention_mask > 0.5, 0.0, -1e30).astype(f32).reshape(B, S, 1)

    in_specs = [
        pl.BlockSpec((TB * S, E), lambda i: (i, 0)),                 # embeddings block
        pl.BlockSpec((TB, S, 1), lambda i: (i, 0, 0)),               # additive mask block
    ] + [pl.BlockSpec(w.shape, lambda i: (0, 0)) for w in consts]    # grid-invariant weights
    out_spec = pl.BlockSpec((1, TB, C_pad), lambda i: (i, 0, 0))

    logits_pad = pl.pallas_call(
        _make_kernel(TB, S),
        out_shape=jax.ShapeDtypeStruct((G, TB, C_pad), f32),
        grid=(G,),
        in_specs=in_specs,
        out_specs=out_spec,
        compiler_params=pltpu.CompilerParams(
            dimension_semantics=("parallel",),
            vmem_limit_bytes=vmem_limit_bytes),
    )(x2, addmask, *consts)

    logits = logits_pad.reshape(B, C_pad)[:, :num_classes]
    return {'logits': logits}


def init_params(key, E, d_out, hidden, num_classes, ddesc):
    shapes = {
        'query': (1, E),
        'wq': (E, E), 'bq': (1, E),
        'wk': (E, E), 'bk': (1, E),
        'wv': (E, E), 'bv': (1, E),
        'wo': (E, E), 'bo': (1, E),
        'wp': (d_out, E), 'bp': (1, d_out),
        'wc1': (hidden, d_out), 'bc1': (1, hidden),
        'wc2': (num_classes, hidden), 'bc2': (1, num_classes),
        'wr1': (hidden, d_out), 'br1': (1, hidden),     # regressor head (unused at inference)
        'wr2': (ddesc, hidden), 'br2': (1, ddesc),
    }
    keys = jax.random.split(key, len(shapes))
    return {name: (0.1 * jax.random.normal(k, shp)).astype(jnp.float32)
            for (name, shp), k in zip(shapes.items(), keys)}


def reference_forward(x, mask, p, num_heads=NUM_HEADS):
    """Pure-JAX reference of the same math (for correctness check)."""
    B, S, E = x.shape
    dh = E // num_heads
    Q = p['query'] @ p['wq'].T + p['bq']                       # [1, E]
    K = jnp.einsum('bse,fe->bsf', x, p['wk']) + p['bk']        # [B, S, E]
    V = jnp.einsum('bse,fe->bsf', x, p['wv']) + p['bv']
    Qh = Q.reshape(1, num_heads, dh)
    Kh = K.reshape(B, S, num_heads, dh)
    Vh = V.reshape(B, S, num_heads, dh)
    scores = jnp.einsum('qhd,bshd->bhs', Qh, Kh) / math.sqrt(dh)
    scores = jnp.where(mask[:, None, :] > 0.5, scores, -1e30)
    w = jax.nn.softmax(scores, axis=-1)
    ctx = jnp.einsum('bhs,bshd->bhd', w, Vh).reshape(B, E)
    attn = ctx @ p['wo'].T + p['bo']
    pooled = attn @ p['wp'].T + p['bp']
    hc = jnp.maximum(pooled @ p['wc1'].T + p['bc1'], 0.0)
    logits = hc @ p['wc2'].T + p['bc2']
    return logits


if __name__ == "__main__":
    B, S = 2, 8
    input_embed_dim = 32      # E
    output_embed_dim = 32     # d_out
    hidden_dim = 32
    num_classes = 4
    descriptors_dim = 3

    key = jax.random.PRNGKey(0)
    kx, kp = jax.random.split(key)
    embeddings = jax.random.normal(kx, (B, S, input_embed_dim), dtype=jnp.float32)
    # second sequence has 3 padding positions
    attention_mask = jnp.array([[1.0] * S,
                                [1.0] * 5 + [0.0] * (S - 5)], dtype=jnp.float32)

    params = init_params(kp, input_embed_dim, output_embed_dim, hidden_dim,
                         num_classes, descriptors_dim)

    ref_logits = reference_forward(embeddings, attention_mask, params)

    # f32-compute path: tight check of the algebraic folding / kernel structure.
    out_f32 = classif_reg_mhap_forward(embeddings, attention_mask, params,
                                       compute_dtype=jnp.float32)
    logits_f32 = jax.block_until_ready(out_f32['logits'])
    assert logits_f32.shape == (B, num_classes)
    assert bool(jnp.allclose(logits_f32, ref_logits, atol=5e-4, rtol=5e-4)), \
        "f32 Pallas kernel output does not match reference"

    # default bf16-compute path (f32 accumulation / softmax): looser tolerance.
    out_bf16 = classif_reg_mhap_forward(embeddings, attention_mask, params)
    logits_bf16 = jax.block_until_ready(out_bf16['logits'])
    assert logits_bf16.shape == (B, num_classes)
    assert bool(jnp.allclose(logits_bf16, ref_logits, atol=3e-2, rtol=3e-2)), \
        "bf16 Pallas kernel output does not match reference"

    print("KERNEL_OK")
</pallas_src>

<mosaic_0001>
module attributes {stable_mosaic.version = 11 : i64} {
  func.func @kernel(%arg0: i32, %arg1: memref<8x32xf32, #tpu.memory_space<vmem>>, %arg2: memref<1x8x1xf32, #tpu.memory_space<vmem>>, %arg3: memref<32x4xf32, #tpu.memory_space<vmem>>, %arg4: memref<1x4xf32, #tpu.memory_space<vmem>>, %arg5: memref<128x32xf32, #tpu.memory_space<vmem>>, %arg6: memref<1x32xf32, #tpu.memory_space<vmem>>, %arg7: memref<32x32xf32, #tpu.memory_space<vmem>>, %arg8: memref<1x32xf32, #tpu.memory_space<vmem>>, %arg9: memref<32x128xf32, #tpu.memory_space<vmem>>, %arg10: memref<1x128xf32, #tpu.memory_space<vmem>>, %arg11: memref<1x1x128xf32, #tpu.memory_space<vmem>>) attributes {dimension_semantics = [#tpu.dimension_semantics<parallel>], iteration_bounds = array<i64: 2>, scalar_prefetch = 0 : i64, scratch_operands = 0 : i64, tpu.core_type = #tpu.core_type<tc>, window_params = [{transform_indices = @transform_0, window_bounds = array<i64: 8, 32>}, {transform_indices = @transform_1, window_bounds = array<i64: 1, 8, 1>}, {pipeline_mode = #tpu.pipeline_mode<synchronous>, transform_indices = @transform_2, window_bounds = array<i64: 32, 4>}, {pipeline_mode = #tpu.pipeline_mode<synchronous>, transform_indices = @transform_3, window_bounds = array<i64: 1, 4>}, {pipeline_mode = #tpu.pipeline_mode<synchronous>, transform_indices = @transform_4, window_bounds = array<i64: 128, 32>}, {pipeline_mode = #tpu.pipeline_mode<synchronous>, transform_indices = @transform_5, window_bounds = array<i64: 1, 32>}, {pipeline_mode = #tpu.pipeline_mode<synchronous>, transform_indices = @transform_6, window_bounds = array<i64: 32, 32>}, {pipeline_mode = #tpu.pipeline_mode<synchronous>, transform_indices = @transform_7, window_bounds = array<i64: 1, 32>}, {pipeline_mode = #tpu.pipeline_mode<synchronous>, transform_indices = @transform_8, window_bounds = array<i64: 32, 128>}, {pipeline_mode = #tpu.pipeline_mode<synchronous>, transform_indices = @transform_9, window_bounds = array<i64: 1, 128>}, {transform_indices = @transform_10, window_bounds = array<i64: 1, 1, 128>}]} {
    %c0 = arith.constant 0 : index
    %c0_0 = arith.constant 0 : index
    %0 = vector.load %arg1[%c0, %c0_0] : memref<8x32xf32, #tpu.memory_space<vmem>>, vector<8x32xf32>
    %c0_1 = arith.constant 0 : index
    %c0_2 = arith.constant 0 : index
    %1 = vector.load %arg3[%c0_1, %c0_2] : memref<32x4xf32, #tpu.memory_space<vmem>>, vector<32x4xf32>
    %cst = arith.constant dense<0.000000e+00> : vector<8x4xf32>
    %2 = tpu.matmul %0, %1, %cst {dimension_numbers = #tpu.dot_dimension_numbers<[1], [0], [0], [1], [0, 0, 1, 1], [], []>} : vector<8x32xf32>, vector<32x4xf32>, vector<8x4xf32> -> vector<8x4xf32>
    %c0_3 = arith.constant 0 : index
    %c0_4 = arith.constant 0 : index
    %3 = vector.load %arg4[%c0_3, %c0_4] : memref<1x4xf32, #tpu.memory_space<vmem>>, vector<1x4xf32>
    %4 = vector.broadcast %3 : vector<1x4xf32> to vector<8x4xf32>
    %5 = arith.addf %2, %4 : vector<8x4xf32>
    %6 = vector.shape_cast %5 : vector<8x4xf32> to vector<1x8x4xf32>
    %c0_5 = arith.constant 0 : index
    %c0_6 = arith.constant 0 : index
    %c0_7 = arith.constant 0 : index
    %7 = vector.load %arg2[%c0_5, %c0_6, %c0_7] : memref<1x8x1xf32, #tpu.memory_space<vmem>>, vector<1x8x1xf32>
    %8 = vector.broadcast %7 : vector<1x8x1xf32> to vector<1x8x4xf32>
    %9 = arith.addf %6, %8 : vector<1x8x4xf32>
    %cst_8 = arith.constant dense<0xFF800000> : vector<1x4xf32>
    %10 = vector.multi_reduction <maximumf>, %9, %cst_8 [1] : vector<1x8x4xf32> to vector<1x4xf32>
    %11 = vector.shape_cast %10 : vector<1x4xf32> to vector<1x1x4xf32>
    %12 = vector.broadcast %11 : vector<1x1x4xf32> to vector<1x8x4xf32>
    %13 = arith.subf %9, %12 : vector<1x8x4xf32>
    %14 = math.exp %13 : vector<1x8x4xf32>
    %cst_9 = arith.constant dense<0.000000e+00> : vector<1x4xf32>
    %15 = vector.multi_reduction <add>, %14, %cst_9 [1] : vector<1x8x4xf32> to vector<1x4xf32>
    %16 = vector.shape_cast %15 : vector<1x4xf32> to vector<1x1x4xf32>
    %17 = vector.broadcast %16 : vector<1x1x4xf32> to vector<1x8x4xf32>
    %18 = arith.divf %14, %17 : vector<1x8x4xf32>
    %19 = vector.shape_cast %0 : vector<8x32xf32> to vector<1x8x32xf32>
    %c0_10 = arith.constant 0 : index
    %c0_11 = arith.constant 0 : index
    %20 = vector.load %arg6[%c0_10, %c0_11] : memref<1x32xf32, #tpu.memory_space<vmem>>, vector<1x32xf32>
    %21 = vector.extract_strided_slice %18 {offsets = [0, 0, 0], sizes = [1, 8, 1], strides = [1, 1, 1]} : vector<1x8x4xf32> to vector<1x8x1xf32>
    %22 = vector.broadcast %21 : vector<1x8x1xf32> to vector<1x8x32xf32>
    %23 = arith.mulf %22, %19 : vector<1x8x32xf32>
    %cst_12 = arith.constant dense<0.000000e+00> : vector<1x32xf32>
    %24 = vector.multi_reduction <add>, %23, %cst_12 [1] : vector<1x8x32xf32> to vector<1x32xf32>
    %c0_13 = arith.constant 0 : index
    %c0_14 = arith.constant 0 : index
    %25 = vector.load %arg5[%c0_13, %c0_14] : memref<128x32xf32, #tpu.memory_space<vmem>>, vector<32x32xf32>
    %cst_15 = arith.constant dense<0.000000e+00> : vector<1x32xf32>
    %26 = tpu.matmul %24, %25, %cst_15 {dimension_numbers = #tpu.dot_dimension_numbers<[1], [0], [0], [1], [0, 0, 1, 1], [], []>} : vector<1x32xf32>, vector<32x32xf32>, vector<1x32xf32> -> vector<1x32xf32>
    %27 = arith.addf %20, %26 : vector<1x32xf32>
    %28 = vector.extract_strided_slice %18 {offsets = [0, 0, 1], sizes = [1, 8, 1], strides = [1, 1, 1]} : vector<1x8x4xf32> to vector<1x8x1xf32>
    %29 = vector.broadcast %28 : vector<1x8x1xf32> to vector<1x8x32xf32>
    %30 = arith.mulf %29, %19 : vector<1x8x32xf32>
    %cst_16 = arith.constant dense<0.000000e+00> : vector<1x32xf32>
    %31 = vector.multi_reduction <add>, %30, %cst_16 [1] : vector<1x8x32xf32> to vector<1x32xf32>
    %c32 = arith.constant 32 : index
    %c0_17 = arith.constant 0 : index
    %32 = vector.load %arg5[%c32, %c0_17] : memref<128x32xf32, #tpu.memory_space<vmem>>, vector<32x32xf32>
    %cst_18 = arith.constant dense<0.000000e+00> : vector<1x32xf32>
    %33 = tpu.matmul %31, %32, %cst_18 {dimension_numbers = #tpu.dot_dimension_numbers<[1], [0], [0], [1], [0, 0, 1, 1], [], []>} : vector<1x32xf32>, vector<32x32xf32>, vector<1x32xf32> -> vector<1x32xf32>
    %34 = arith.addf %27, %33 : vector<1x32xf32>
    %35 = vector.extract_strided_slice %18 {offsets = [0, 0, 2], sizes = [1, 8, 1], strides = [1, 1, 1]} : vector<1x8x4xf32> to vector<1x8x1xf32>
    %36 = vector.broadcast %35 : vector<1x8x1xf32> to vector<1x8x32xf32>
    %37 = arith.mulf %36, %19 : vector<1x8x32xf32>
    %cst_19 = arith.constant dense<0.000000e+00> : vector<1x32xf32>
    %38 = vector.multi_reduction <add>, %37, %cst_19 [1] : vector<1x8x32xf32> to vector<1x32xf32>
    %c64 = arith.constant 64 : index
    %c0_20 = arith.constant 0 : index
    %39 = vector.load %arg5[%c64, %c0_20] : memref<128x32xf32, #tpu.memory_space<vmem>>, vector<32x32xf32>
    %cst_21 = arith.constant dense<0.000000e+00> : vector<1x32xf32>
    %40 = tpu.matmul %38, %39, %cst_21 {dimension_numbers = #tpu.dot_dimension_numbers<[1], [0], [0], [1], [0, 0, 1, 1], [], []>} : vector<1x32xf32>, vector<32x32xf32>, vector<1x32xf32> -> vector<1x32xf32>
    %41 = arith.addf %34, %40 : vector<1x32xf32>
    %42 = vector.extract_strided_slice %18 {offsets = [0, 0, 3], sizes = [1, 8, 1], strides = [1, 1, 1]} : vector<1x8x4xf32> to vector<1x8x1xf32>
    %43 = vector.broadcast %42 : vector<1x8x1xf32> to vector<1x8x32xf32>
    %44 = arith.mulf %43, %19 : vector<1x8x32xf32>
    %cst_22 = arith.constant dense<0.000000e+00> : vector<1x32xf32>
    %45 = vector.multi_reduction <add>, %44, %cst_22 [1] : vector<1x8x32xf32> to vector<1x32xf32>
    %c96 = arith.constant 96 : index
    %c0_23 = arith.constant 0 : index
    %46 = vector.load %arg5[%c96, %c0_23] : memref<128x32xf32, #tpu.memory_space<vmem>>, vector<32x32xf32>
    %cst_24 = arith.constant dense<0.000000e+00> : vector<1x32xf32>
    %47 = tpu.matmul %45, %46, %cst_24 {dimension_numbers = #tpu.dot_dimension_numbers<[1], [0], [0], [1], [0, 0, 1, 1], [], []>} : vector<1x32xf32>, vector<32x32xf32>, vector<1x32xf32> -> vector<1x32xf32>
    %48 = arith.addf %41, %47 : vector<1x32xf32>
    %c0_25 = arith.constant 0 : index
    %c0_26 = arith.constant 0 : index
    %49 = vector.load %arg7[%c0_25, %c0_26] : memref<32x32xf32, #tpu.memory_space<vmem>>, vector<32x32xf32>
    %cst_27 = arith.constant dense<0.000000e+00> : vector<1x32xf32>
    %50 = tpu.matmul %48, %49, %cst_27 {dimension_numbers = #tpu.dot_dimension_numbers<[1], [0], [0], [1], [0, 0, 1, 1], [], []>} : vector<1x32xf32>, vector<32x32xf32>, vector<1x32xf32> -> vector<1x32xf32>
    %c0_28 = arith.constant 0 : index
    %c0_29 = arith.constant 0 : index
    %51 = vector.load %arg8[%c0_28, %c0_29] : memref<1x32xf32, #tpu.memory_space<vmem>>, vector<1x32xf32>
    %52 = arith.addf %50, %51 : vector<1x32xf32>
    %cst_30 = arith.constant 0.000000e+00 : f32
    %53 = vector.broadcast %cst_30 : f32 to vector<1x32xf32>
    %54 = arith.maximumf %52, %53 : vector<1x32xf32>
    %c0_31 = arith.constant 0 : index
    %c0_32 = arith.constant 0 : index
    %55 = vector.load %arg9[%c0_31, %c0_32] : memref<32x128xf32, #tpu.memory_space<vmem>>, vector<32x128xf32>
    %cst_33 = arith.constant dense<0.000000e+00> : vector<1x128xf32>
    %56 = tpu.matmul %54, %55, %cst_33 {dimension_numbers = #tpu.dot_dimension_numbers<[1], [0], [0], [1], [0, 0, 1, 1], [], []>} : vector<1x32xf32>, vector<32x128xf32>, vector<1x128xf32> -> vector<1x128xf32>
    %c0_34 = arith.constant 0 : index
    %c0_35 = arith.constant 0 : index
    %57 = vector.load %arg10[%c0_34, %c0_35] : memref<1x128xf32, #tpu.memory_space<vmem>>, vector<1x128xf32>
    %58 = arith.addf %56, %57 : vector<1x128xf32>
    %59 = vector.shape_cast %58 : vector<1x128xf32> to vector<1x1x128xf32>
    %c0_36 = arith.constant 0 : index
    %c0_37 = arith.constant 0 : index
    %c0_38 = arith.constant 0 : index
    %60 = vector.load %arg11[%c0_36, %c0_37, %c0_38] : memref<1x1x128xf32, #tpu.memory_space<vmem>>, vector<1x1x128xf32>
    tpu.vector_store %arg11[%c0_36, %c0_37, %c0_38], %59 {strides = array<i32>} : memref<1x1x128xf32, #tpu.memory_space<vmem>>, vector<1x1x128xf32>,
    return
  }
  func.func @transform_0(%arg0: i32) -> (i32, i32) {
    %c0_i32 = arith.constant 0 : i32
    %c0_i32_0 = arith.constant 0 : i32
    return %arg0, %c0_i32 : i32, i32
  }
  func.func @transform_1(%arg0: i32) -> (i32, i32, i32) {
    %c0_i32 = arith.constant 0 : i32
    %c0_i32_0 = arith.constant 0 : i32
    %c0_i32_1 = arith.constant 0 : i32
    return %arg0, %c0_i32, %c0_i32_0 : i32, i32, i32
  }
  func.func @transform_2(%arg0: i32) -> (i32, i32) {
    %c0_i32 = arith.constant 0 : i32
    %c0_i32_0 = arith.constant 0 : i32
    %c0_i32_1 = arith.constant 0 : i32
    return %c0_i32, %c0_i32_0 : i32, i32
  }
  func.func @transform_3(%arg0: i32) -> (i32, i32) {
    %c0_i32 = arith.constant 0 : i32
    %c0_i32_0 = arith.constant 0 : i32
    %c0_i32_1 = arith.constant 0 : i32
    return %c0_i32, %c0_i32_0 : i32, i32
  }
  func.func @transform_4(%arg0: i32) -> (i32, i32) {
    %c0_i32 = arith.constant 0 : i32
    %c0_i32_0 = arith.constant 0 : i32
    %c0_i32_1 = arith.constant 0 : i32
    return %c0_i32, %c0_i32_0 : i32, i32
  }
  func.func @transform_5(%arg0: i32) -> (i32, i32) {
    %c0_i32 = arith.constant 0 : i32
    %c0_i32_0 = arith.constant 0 : i32
    %c0_i32_1 = arith.constant 0 : i32
    return %c0_i32, %c0_i32_0 : i32, i32
  }
  func.func @transform_6(%arg0: i32) -> (i32, i32) {
    %c0_i32 = arith.constant 0 : i32
    %c0_i32_0 = arith.constant 0 : i32
    %c0_i32_1 = arith.constant 0 : i32
    return %c0_i32, %c0_i32_0 : i32, i32
  }
  func.func @transform_7(%arg0: i32) -> (i32, i32) {
    %c0_i32 = arith.constant 0 : i32
    %c0_i32_0 = arith.constant 0 : i32
    %c0_i32_1 = arith.constant 0 : i32
    return %c0_i32, %c0_i32_0 : i32, i32
  }
  func.func @transform_8(%arg0: i32) -> (i32, i32) {
    %c0_i32 = arith.constant 0 : i32
    %c0_i32_0 = arith.constant 0 : i32
    %c0_i32_1 = arith.constant 0 : i32
    return %c0_i32, %c0_i32_0 : i32, i32
  }
  func.func @transform_9(%arg0: i32) -> (i32, i32) {
    %c0_i32 = arith.constant 0 : i32
    %c0_i32_0 = arith.constant 0 : i32
    %c0_i32_1 = arith.constant 0 : i32
    return %c0_i32, %c0_i32_0 : i32, i32
  }
  func.func @transform_10(%arg0: i32) -> (i32, i32, i32) {
    %c0_i32 = arith.constant 0 : i32
    %c0_i32_0 = arith.constant 0 : i32
    %c0_i32_1 = arith.constant 0 : i32
    return %arg0, %c0_i32, %c0_i32_0 : i32, i32, i32
  }
}

</mosaic_0001>

<llo_original>
// kernel: tpu_custom_call.1
$region0: #{tpu_custom_call.1}
  #allocation0 [shape = 'u32[]', space=smem, size = 0x4, offset = 0x4, fixed_abs, tag = 'smem constant byte address 0x4 - core index']
  #allocation1 [shape = 'u32[144,128]{1,0:T(1,128)}', space=vmem, size = 0x12000, scoped, tag = 'internal scratch']
  %s0 = inlined_call_operand.vmem [shape: f32[16,32], index: 0, kind: input, shape index: {}]
  %s1 = inlined_call_operand.vmem [shape: f32[2,8,1], index: 1, kind: input, shape index: {}]
  %s2 = inlined_call_operand.vmem [shape: f32[32,4], index: 2, kind: input, shape index: {}]
  %s3 = inlined_call_operand.vmem [shape: f32[1,4], index: 3, kind: input, shape index: {}]
  %s4 = inlined_call_operand.vmem [shape: f32[128,32], index: 4, kind: input, shape index: {}]
  %s5 = inlined_call_operand.vmem [shape: f32[1,32], index: 5, kind: input, shape index: {}]
  %s6 = inlined_call_operand.vmem [shape: f32[32,32], index: 6, kind: input, shape index: {}]
  %s7 = inlined_call_operand.vmem [shape: f32[1,32], index: 7, kind: input, shape index: {}]
  %s8 = inlined_call_operand.vmem [shape: f32[32,128], index: 8, kind: input, shape index: {}]
  %s9 = inlined_call_operand.vmem [shape: f32[1,128], index: 9, kind: input, shape index: {}]
  %s10 = inlined_call_operand.hbm [shape: f32[2,1,128], index: 10, kind: output, shape index: {}]
  %s11 = sld [smem:[#allocation0]]
  $region73: #{tpu_custom_call.1} parent=0
    _
  %s13 = ssub.s32 1, %s11
  %s14 = scalar_select 0, %s13, %s11
  $region1: #{tpu_custom_call.1} parent=0
    #allocation2 [shape = 'u8[1024]{0}', space=vmem, size = 0x400, scoped, tag = 'output window, operand 0']
    #allocation3 [shape = 's32[2]{0}', space=sflag, size = 0x8, scoped, tag = 'scoped memory for tpu_custom_call.1']
    %15 = vsyncpa [#allocation3], 0
    %s16 = scalar_lea.sflag [#allocation3], 1
    %17 = vsyncpa %s16, 0
    loop: start=0, step=1, limit=4
    $region2: #{tpu_custom_call.1} parent=1 // loop_pre_header
      _
    $region3: #{tpu_custom_call.1} parent=1 // loop_header
      %s19 = sphi 0, %s23
      %p20 = scmp.ge.s32.totalorder %s19, 4
      %s29 = sphi 0, %s31
      %s32 = sphi 0, %s29
      %s33 = sphi 0, %s32
      %s49 = sphi 0, %s33
      %s55 = sphi 0, %s57
      %s58 = sphi 0, %s55
      %s59 = sphi 0, %s58
      %s75 = sphi 0, %s59
      %s79 = sphi 0, %s79
      %s81 = sphi 0, %s79
      %s82 = sphi 0, %s81
      %s96 = sphi 0, %s82
      %s100 = sphi 0, %s100
      %s102 = sphi 0, %s100
      %s103 = sphi 0, %s102
      %s117 = sphi 0, %s103
      %s121 = sphi 0, %s121
      %s123 = sphi 0, %s121
      %s124 = sphi 0, %s123
      %s138 = sphi 0, %s124
      %s142 = sphi 0, %s142
      %s144 = sphi 0, %s142
      %s145 = sphi 0, %s144
      %s159 = sphi 0, %s145
      %s163 = sphi 0, %s163
      %s165 = sphi 0, %s163
      %s166 = sphi 0, %s165
      %s180 = sphi 0, %s166
      %s184 = sphi 0, %s184
      %s186 = sphi 0, %s184
      %s187 = sphi 0, %s186
      %s201 = sphi 0, %s187
      %s205 = sphi 0, %s205
      %s207 = sphi 0, %s205
      %s208 = sphi 0, %s207
      %s222 = sphi 0, %s208
      %s226 = sphi 0, %s226
      %s228 = sphi 0, %s226
      %s229 = sphi 0, %s228
      %s243 = sphi 0, %s229
      %s249 = sphi 0, %s251
      %s252 = sphi 0, %s249
      %s253 = sphi 0, %s252
      %s269 = sphi 0, %s253
    $region4: #{tpu_custom_call.1} parent=1 // loop_header_branch
      %22 = sbr.rel (%p20) target = $region8
    $region5: #{tpu_custom_call.1} parent=1 // loop_body
      %s24 = ssub.s32 %s19, 1
      %s25 = ssub.s32 %s19, 2
      %s26 = sadd.s32 %s19, 1
      %s27 = ssub.s32 %s19, %s26
      %p28 = scmp.eq.s32.totalorder %s27, 0
      %s30 = sadd.s32 %s29, 1
      %s31 = scalar_select %p28, %s29, %s30
      %p34 = pneg %p28
      %p35 = scmp.eq.s32.totalorder %s19, 1
      %p36 = por %p34, %p35
      %p37 = scmp.ne.s32.totalorder %s29, %s32
      %p38 = scmp.eq.s32.totalorder %s19, 0
      %p39 = por %p37, %p38
      %p40 = scmp.ne.s32.totalorder %s29, %s32
      %p41 = scmp.eq.s32.totalorder %s24, 1
      %p42 = por %p40, %p41
      %p43 = scmp.ne.s32.totalorder %s32, %s33
      %p44 = scmp.eq.s32.totalorder %s24, 0
      %p45 = por %p43, %p44
      %p46 = scmp.ne.s32.totalorder %s32, %s33
      %p47 = scmp.eq.s32.totalorder %s25, 1
      %p48 = por %p46, %p47
      %p50 = scmp.ne.s32.totalorder %s33, %s49
      %p51 = scmp.eq.s32.totalorder %s25, 0
      %p52 = por %p50, %p51
      %s53 = ssub.s32 %s19, %s26
      %p54 = scmp.eq.s32.totalorder %s53, 0
      %s56 = sadd.s32 %s55, 1
      %s57 = scalar_select %p54, %s55, %s56
      %p60 = pneg %p54
      %p61 = scmp.eq.s32.totalorder %s19, 1
      %p62 = por %p60, %p61
      %p63 = scmp.ne.s32.totalorder %s55, %s58
      %p64 = scmp.eq.s32.totalorder %s19, 0
      %p65 = por %p63, %p64
      %p66 = scmp.ne.s32.totalorder %s55, %s58
      %p67 = scmp.eq.s32.totalorder %s24, 1
      %p68 = por %p66, %p67
      %p69 = scmp.ne.s32.totalorder %s58, %s59
      %p70 = scmp.eq.s32.totalorder %s24, 0
      %p71 = por %p69, %p70
      %p72 = scmp.ne.s32.totalorder %s58, %s59
      %p73 = scmp.eq.s32.totalorder %s25, 1
      %p74 = por %p72, %p73
      %p76 = scmp.ne.s32.totalorder %s59, %s75
      %p77 = scmp.eq.s32.totalorder %s25, 0
      %p78 = por %p76, %p77
      %s80 = sadd.s32 %s79, 1
      %p83 = scmp.eq.s32.totalorder %s19, 1
      %p84 = scmp.ne.s32.totalorder %s79, %s81
      %p85 = scmp.eq.s32.totalorder %s19, 0
      %p86 = por %p84, %p85
      %p87 = scmp.ne.s32.totalorder %s79, %s81
      %p88 = scmp.eq.s32.totalorder %s24, 1
      %p89 = por %p87, %p88
      %p90 = scmp.ne.s32.totalorder %s81, %s82
      %p91 = scmp.eq.s32.totalorder %s24, 0
      %p92 = por %p90, %p91
      %p93 = scmp.ne.s32.totalorder %s81, %s82
      %p94 = scmp.eq.s32.totalorder %s25, 1
      %p95 = por %p93, %p94
      %p97 = scmp.ne.s32.totalorder %s82, %s96
      %p98 = scmp.eq.s32.totalorder %s25, 0
      %p99 = por %p97, %p98
      %s101 = sadd.s32 %s100, 1
      %p104 = scmp.eq.s32.totalorder %s19, 1
      %p105 = scmp.ne.s32.totalorder %s100, %s102
      %p106 = scmp.eq.s32.totalorder %s19, 0
      %p107 = por %p105, %p106
      %p108 = scmp.ne.s32.totalorder %s100, %s102
      %p109 = scmp.eq.s32.totalorder %s24, 1
      %p110 = por %p108, %p109
      %p111 = scmp.ne.s32.totalorder %s102, %s103
      %p112 = scmp.eq.s32.totalorder %s24, 0
      %p113 = por %p111, %p112
      %p114 = scmp.ne.s32.totalorder %s102, %s103
      %p115 = scmp.eq.s32.totalorder %s25, 1
      %p116 = por %p114, %p115
      %p118 = scmp.ne.s32.totalorder %s103, %s117
      %p119 = scmp.eq.s32.totalorder %s25, 0
      %p120 = por %p118, %p119
      %s122 = sadd.s32 %s121, 1
      %p125 = scmp.eq.s32.totalorder %s19, 1
      %p126 = scmp.ne.s32.totalorder %s121, %s123
      %p127 = scmp.eq.s32.totalorder %s19, 0
      %p128 = por %p126, %p127
      %p129 = scmp.ne.s32.totalorder %s121, %s123
      %p130 = scmp.eq.s32.totalorder %s24, 1
      %p131 = por %p129, %p130
      %p132 = scmp.ne.s32.totalorder %s123, %s124
      %p133 = scmp.eq.s32.totalorder %s24, 0
      %p134 = por %p132, %p133
      %p135 = scmp.ne.s32.totalorder %s123, %s124
      %p136 = scmp.eq.s32.totalorder %s25, 1
      %p137 = por %p135, %p136
      %p139 = scmp.ne.s32.totalorder %s124, %s138
      %p140 = scmp.eq.s32.totalorder %s25, 0
      %p141 = por %p139, %p140
      %s143 = sadd.s32 %s142, 1
      %p146 = scmp.eq.s32.totalorder %s19, 1
      %p147 = scmp.ne.s32.totalorder %s142, %s144
      %p148 = scmp.eq.s32.totalorder %s19, 0
      %p149 = por %p147, %p148
      %p150 = scmp.ne.s32.totalorder %s142, %s144
      %p151 = scmp.eq.s32.totalorder %s24, 1
      %p152 = por %p150, %p151
      %p153 = scmp.ne.s32.totalorder %s144, %s145
      %p154 = scmp.eq.s32.totalorder %s24, 0
      %p155 = por %p153, %p154
      %p156 = scmp.ne.s32.totalorder %s144, %s145
      %p157 = scmp.eq.s32.totalorder %s25, 1
      %p158 = por %p156, %p157
      %p160 = scmp.ne.s32.totalorder %s145, %s159
      %p161 = scmp.eq.s32.totalorder %s25, 0
      %p162 = por %p160, %p161
      %s164 = sadd.s32 %s163, 1
      %p167 = scmp.eq.s32.totalorder %s19, 1
      %p168 = scmp.ne.s32.totalorder %s163, %s165
      %p169 = scmp.eq.s32.totalorder %s19, 0
      %p170 = por %p168, %p169
      %p171 = scmp.ne.s32.totalorder %s163, %s165
      %p172 = scmp.eq.s32.totalorder %s24, 1
      %p173 = por %p171, %p172
      %p174 = scmp.ne.s32.totalorder %s165, %s166
      %p175 = scmp.eq.s32.totalorder %s24, 0
      %p176 = por %p174, %p175
      %p177 = scmp.ne.s32.totalorder %s165, %s166
      %p178 = scmp.eq.s32.totalorder %s25, 1
      %p179 = por %p177, %p178
      %p181 = scmp.ne.s32.totalorder %s166, %s180
      %p182 = scmp.eq.s32.totalorder %s25, 0
      %p183 = por %p181, %p182
      %s185 = sadd.s32 %s184, 1
      %p188 = scmp.eq.s32.totalorder %s19, 1
      %p189 = scmp.ne.s32.totalorder %s184, %s186
      %p190 = scmp.eq.s32.totalorder %s19, 0
      %p191 = por %p189, %p190
      %p192 = scmp.ne.s32.totalorder %s184, %s186
      %p193 = scmp.eq.s32.totalorder %s24, 1
      %p194 = por %p192, %p193
      %p195 = scmp.ne.s32.totalorder %s186, %s187
      %p196 = scmp.eq.s32.totalorder %s24, 0
      %p197 = por %p195, %p196
      %p198 = scmp.ne.s32.totalorder %s186, %s187
      %p199 = scmp.eq.s32.totalorder %s25, 1
      %p200 = por %p198, %p199
      %p202 = scmp.ne.s32.totalorder %s187, %s201
      %p203 = scmp.eq.s32.totalorder %s25, 0
      %p204 = por %p202, %p203
      %s206 = sadd.s32 %s205, 1
      %p209 = scmp.eq.s32.totalorder %s19, 1
      %p210 = scmp.ne.s32.totalorder %s205, %s207
      %p211 = scmp.eq.s32.totalorder %s19, 0
      %p212 = por %p210, %p211
      %p213 = scmp.ne.s32.totalorder %s205, %s207
      %p214 = scmp.eq.s32.totalorder %s24, 1
      %p215 = por %p213, %p214
      %p216 = scmp.ne.s32.totalorder %s207, %s208
      %p217 = scmp.eq.s32.totalorder %s24, 0
      %p218 = por %p216, %p217
      %p219 = scmp.ne.s32.totalorder %s207, %s208
      %p220 = scmp.eq.s32.totalorder %s25, 1
      %p221 = por %p219, %p220
      %p223 = scmp.ne.s32.totalorder %s208, %s222
      %p224 = scmp.eq.s32.totalorder %s25, 0
      %p225 = por %p223, %p224
      %s227 = sadd.s32 %s226, 1
      %p230 = scmp.eq.s32.totalorder %s19, 1
      %p231 = scmp.ne.s32.totalorder %s226, %s228
      %p232 = scmp.eq.s32.totalorder %s19, 0
      %p233 = por %p231, %p232
      %p234 = scmp.ne.s32.totalorder %s226, %s228
      %p235 = scmp.eq.s32.totalorder %s24, 1
      %p236 = por %p234, %p235
      %p237 = scmp.ne.s32.totalorder %s228, %s229
      %p238 = scmp.eq.s32.totalorder %s24, 0
      %p239 = por %p237, %p238
      %p240 = scmp.ne.s32.totalorder %s228, %s229
      %p241 = scmp.eq.s32.totalorder %s25, 1
      %p242 = por %p240, %p241
      %p244 = scmp.ne.s32.totalorder %s229, %s243
      %p245 = scmp.eq.s32.totalorder %s25, 0
      %p246 = por %p244, %p245
      %s247 = ssub.s32 %s19, %s26
      %p248 = scmp.eq.s32.totalorder %s247, 0
      %s250 = sadd.s32 %s249, 1
      %s251 = scalar_select %p248, %s249, %s250
      %p254 = pneg %p248
      %p255 = scmp.eq.s32.totalorder %s19, 1
      %p256 = por %p254, %p255
      %p257 = scmp.ne.s32.totalorder %s249, %s252
      %p258 = scmp.eq.s32.totalorder %s19, 0
      %p259 = por %p257, %p258
      %p260 = scmp.ne.s32.totalorder %s249, %s252
      %p261 = scmp.eq.s32.totalorder %s24, 1
      %p262 = por %p260, %p261
      %p263 = scmp.ne.s32.totalorder %s252, %s253
      %p264 = scmp.eq.s32.totalorder %s24, 0
      %p265 = por %p263, %p264
      %p266 = scmp.ne.s32.totalorder %s252, %s253
      %p267 = scmp.eq.s32.totalorder %s25, 1
      %p268 = por %p266, %p267
      %p270 = scmp.ne.s32.totalorder %s253, %s269
      %p271 = scmp.eq.s32.totalorder %s25, 0
      %p272 = por %p270, %p271
      %p273 = scmp.le.s32.totalorder 1, %s19
      %p274 = scmp.lt.s32.totalorder %s19, 3
      %p275 = pnand %p273, %p274
      %p276 = pneg %p275
      // Predicated region
      $region9: #{tpu_custom_call.1} parent=5 // pred_check
        _
      $region10: #{tpu_custom_call.1} parent=5 // pred_check_branch
        %278 = sbr.rel (%p275) target = $region12
      $region11: #{tpu_custom_call.1} parent=5 // pred_region
        %s279 = ssub.s32 %s19, 1
        // Predicated region
        $region13: #{tpu_custom_call.1} parent=11 // pred_check
          %p280 = pneg %p92
        $region14: #{tpu_custom_call.1} parent=11 // pred_check_branch
          %282 = sbr.rel (%p280) target = $region16
        $region15: #{tpu_custom_call.1} parent=11 // pred_region
          _
        $region16: #{tpu_custom_call.1} parent=11 // pred_fallthru
          _
        // Predicated region
        $region17: #{tpu_custom_call.1} parent=11 // pred_check
          %p283 = pneg %p113
        $region18: #{tpu_custom_call.1} parent=11 // pred_check_branch
          %285 = sbr.rel (%p283) target = $region20
        $region19: #{tpu_custom_call.1} parent=11 // pred_region
          _
        $region20: #{tpu_custom_call.1} parent=11 // pred_fallthru
          _
        // Predicated region
        $region21: #{tpu_custom_call.1} parent=11 // pred_check
          %p286 = pneg %p134
        $region22: #{tpu_custom_call.1} parent=11 // pred_check_branch
          %288 = sbr.rel (%p286) target = $region24
        $region23: #{tpu_custom_call.1} parent=11 // pred_region
          _
        $region24: #{tpu_custom_call.1} parent=11 // pred_fallthru
          _
        // Predicated region
        $region25: #{tpu_custom_call.1} parent=11 // pred_check
          %p289 = pneg %p155
        $region26: #{tpu_custom_call.1} parent=11 // pred_check_branch
          %291 = sbr.rel (%p289) target = $region28
        $region27: #{tpu_custom_call.1} parent=11 // pred_region
          _
        $region28: #{tpu_custom_call.1} parent=11 // pred_fallthru
          _
        // Predicated region
        $region29: #{tpu_custom_call.1} parent=11 // pred_check
          %p292 = pneg %p176
        $region30: #{tpu_custom_call.1} parent=11 // pred_check_branch
          %294 = sbr.rel (%p292) target = $region32
        $region31: #{tpu_custom_call.1} parent=11 // pred_region
          _
        $region32: #{tpu_custom_call.1} parent=11 // pred_fallthru
          _
        // Predicated region
        $region33: #{tpu_custom_call.1} parent=11 // pred_check
          %p295 = pneg %p197
        $region34: #{tpu_custom_call.1} parent=11 // pred_check_branch
          %297 = sbr.rel (%p295) target = $region36
        $region35: #{tpu_custom_call.1} parent=11 // pred_region
          _
        $region36: #{tpu_custom_call.1} parent=11 // pred_fallthru
          _
        // Predicated region
        $region37: #{tpu_custom_call.1} parent=11 // pred_check
          %p298 = pneg %p218
        $region38: #{tpu_custom_call.1} parent=11 // pred_check_branch
          %300 = sbr.rel (%p298) target = $region40
        $region39: #{tpu_custom_call.1} parent=11 // pred_region
          _
        $region40: #{tpu_custom_call.1} parent=11 // pred_fallthru
          _
        // Predicated region
        $region41: #{tpu_custom_call.1} parent=11 // pred_check
          %p301 = pneg %p239
        $region42: #{tpu_custom_call.1} parent=11 // pred_check_branch
          %303 = sbr.rel (%p301) target = $region44
        $region43: #{tpu_custom_call.1} parent=11 // pred_region
          _
        $region44: #{tpu_custom_call.1} parent=11 // pred_fallthru
          _
      $region12: #{tpu_custom_call.1} parent=5 // pred_fallthru
        _
      %p304 = scmp.lt.s32.totalorder %s19, 2
      // Predicated region
      $region45: #{tpu_custom_call.1} parent=5 // pred_check
        %p305 = pneg %p304
      $region46: #{tpu_custom_call.1} parent=5 // pred_check_branch
        %307 = sbr.rel (%p305) target = $region48
      $region47: #{tpu_custom_call.1} parent=5 // pred_region
        // Predicated region
        $region49: #{tpu_custom_call.1} parent=47 // pred_check
          %p308 = pneg %p39
        $region50: #{tpu_custom_call.1} parent=47 // pred_check_branch
          %310 = sbr.rel (%p308) target = $region52
        $region51: #{tpu_custom_call.1} parent=47 // pred_region
          %p311 = scmp.lt.s32.totalorder %s19, 1
          %s312 = scalar_select %p311, %s19, 1
          %s313 = smul.addr %s312, 8
          %s314 = scalar_lea.vmem %s0, %s313
        $region52: #{tpu_custom_call.1} parent=47 // pred_fallthru
          _
        // Predicated region
        $region53: #{tpu_custom_call.1} parent=47 // pred_check
          %p315 = pneg %p65
        $region54: #{tpu_custom_call.1} parent=47 // pred_check_branch
          %317 = sbr.rel (%p315) target = $region56
        $region55: #{tpu_custom_call.1} parent=47 // pred_region
          %p318 = scmp.lt.s32.totalorder %s19, 1
          %s319 = scalar_select %p318, %s19, 1
          %s320 = smul.addr %s319, 8
          %s321 = scalar_lea.vmem %s1, %s320
        $region56: #{tpu_custom_call.1} parent=47 // pred_fallthru
          _
      $region48: #{tpu_custom_call.1} parent=5 // pred_fallthru
        _
      %p322 = scmp.le.s32.totalorder 1, %s19
      %p323 = scmp.lt.s32.totalorder %s19, 3
      %p324 = pnand %p322, %p323
      %p325 = pneg %p324
      // Predicated region
      $region57: #{tpu_custom_call.1} parent=5 // pred_check
        _
      $region58: #{tpu_custom_call.1} parent=5 // pred_check_branch
        %327 = sbr.rel (%p324) target = $region60
      $region59: #{tpu_custom_call.1} parent=5 // pred_region
        %s328 = ssub.s32 %s19, 1
        %p329 = scmp.lt.s32.totalorder %s24, 1
        %s330 = scalar_select %p329, %s24, 1
        %s331 = smul.addr %s330, 8
        %s332 = scalar_lea.vmem %s0, %s331
        %p333 = pneg %p45
        %p334 = pneg %p42
        %p335 = scmp.lt.s32.totalorder %s24, 1
        %s336 = scalar_select %p335, %s24, 1
        %s337 = smul.addr %s336, 8
        %s338 = scalar_lea.vmem %s1, %s337
        %p339 = pneg %p71
        %p340 = pneg %p68
        %p341 = pneg %p92
        %p342 = pneg %p89
        %p343 = pneg %p113
        %p344 = pneg %p110
        %p345 = pneg %p134
        %p346 = pneg %p131
        %p347 = pneg %p155
        %p348 = pneg %p152
        %p349 = pneg %p176
        %p350 = pneg %p173
        %p351 = pneg %p197
        %p352 = pneg %p194
        %p353 = pneg %p218
        %p354 = pneg %p215
        %p355 = pneg %p239
        %p356 = pneg %p236
        %p357 = pneg %p265
        %p358 = pneg %p262
        %s359 = sand.u32 %s252, 1
        %s360 = scalar_lea.sflag [#allocation3], %s359
        %s361 = sand.u32 %s252, 1
        %s362 = scalar_lea.vmem [#allocation2], %s361
        %p363 = scmp.lt.s32.totalorder %s24, 1
        %s364 = scalar_select %p363, %s24, 1
        %s365 = smul.addr %s364, 8
        %s366 = scalar_lea.vmem %s0, %s365
        %p367 = scmp.lt.s32.totalorder %s24, 1
        %s368 = scalar_select %p367, %s24, 1
        %s369 = smul.addr %s368, 8
        %s370 = scalar_lea.vmem %s1, %s369
        %v371 = vld [vmem:[%s366] sm:$0xff]
        %v372 = vld [vmem:[%s2] sm:$0xff]
        %v373 = vld [vmem:[%s2 + $0x8] sm:$0xff]
        %v374 = vld [vmem:[%s2 + $0x10] sm:$0xff]
        %v375 = vld [vmem:[%s2 + $0x18] sm:$0xff]
        %v376 = vld [vmem:[%s3] sm:$0x1]
        %v378 = vlaneseq
        %v379 = vshrl.u32 %v378, 7
        %v380 = vsub.s32 0, %v379
        %v381 = vrot.slane %v376, %v380
        %vm383 = vcmask 261120
        %v385 = vsel %vm383, %v371, 0
        %387 = vmatprep.subr.mxu0 0.0
        %388 = vmatpush1.msra.mxu0 %v372
        %389 = vmatprep.subr.mxu0 0.0
        %390 = vmatpush1.msra.mxu0 %v373
        %391 = vmatprep.subr.mxu0 0.0
        %392 = vmatpush1.msra.mxu0 %v374
        %393 = vmatprep.subr.mxu0 0.0
        %394 = vmatpush1.msra.mxu0 %v375
        %395 = vmatprep.subr.mxu0 0.0
        %396 = vmatpush1.msra.mxu0 0.0
        %397 = vmatprep.subr.mxu0 0.0
        %398 = vmatpush1.msra.mxu0 0.0
        %399 = vmatprep.subr.mxu0 0.0
        %400 = vmatpush1.msra.mxu0 0.0
        %401 = vmatprep.subr.mxu0 0.0
        %402 = vmatpush1.msra.mxu0 0.0
        %403 = vmatprep.subr.mxu0 0.0
        %404 = vmatpush1.msra.mxu0 0.0
        %405 = vmatprep.subr.mxu0 0.0
        %406 = vmatpush1.msra.mxu0 0.0
        %407 = vmatprep.subr.mxu0 0.0
        %408 = vmatpush1.msra.mxu0 0.0
        %409 = vmatprep.subr.mxu0 0.0
        %410 = vmatpush1.msra.mxu0 0.0
        %411 = vmatprep.subr.mxu0 0.0
        %412 = vmatpush1.msra.mxu0 0.0
        %413 = vmatprep.subr.mxu0 0.0
        %414 = vmatpush1.msra.mxu0 0.0
        %415 = vmatprep.subr.mxu0 0.0
        %416 = vmatpush1.msra.mxu0 0.0
        %417 = vmatprep.subr.mxu0 0.0
        %418 = vmatpush1.msra.mxu0 0.0
        %419 = vmatprep.subr.mxu0 0.0
        %420 = vmatpush1.msra.mxu0 0.0
        %421 = vmatprep.subr.mxu0 0.0
        %422 = vmatpush1.msra.mxu0 0.0
        %423 = vmatprep.subr.mxu0 0.0
        %424 = vmatpush1.msra.mxu0 0.0
        %425 = vmatprep.subr.mxu0 0.0
        %426 = vmatpush1.msra.mxu0 0.0
        %427 = vmatprep.subr.mxu0 0.0
        %428 = vmatpush1.msra.mxu0 0.0
        %429 = vmatprep.subr.mxu0 0.0
        %430 = vmatpush1.msra.mxu0 0.0
        %431 = vmatprep.subr.mxu0 0.0
        %432 = vmatpush1.msra.mxu0 0.0
        %433 = vmatprep.subr.mxu0 0.0
        %434 = vmatpush1.msra.mxu0 0.0
        %435 = vmatprep.subr.mxu0 0.0
        %436 = vmatpush1.msra.mxu0 0.0
        %437 = vmatprep.subr.mxu0 0.0
        %438 = vmatpush1.msra.mxu0 0.0
        %439 = vmatprep.subr.mxu0 0.0
        %440 = vmatpush1.msra.mxu0 0.0
        %441 = vmatprep.subr.mxu0 0.0
        %442 = vmatpush1.msra.mxu0 0.0
        %443 = vmatprep.subr.mxu0 0.0
        %444 = vmatpush1.msra.mxu0 0.0
        %445 = vmatprep.subr.mxu0 0.0
        %446 = vmatpush1.msra.mxu0 0.0
        %447 = vmatprep.subr.mxu0 0.0
        %448 = vmatpush1.msra.mxu0 0.0
        %449 = vmatprep.subr.mxu0 0.0
        %450 = vmatpush1.msra.mxu0 0.0
        %451 = vmatprep.mubr.f32.mxu0 0.0
        %452 = vmatmul.mubr.f32.gmra.mrb[0].mxu0 %v385
        %v453 = vpop.f32.mrb[0].mxu0
        %v454 = vadd.f32 %v381, %v453
        %v455 = vpop.f32.mrb[0].mxu0
        %456 = vdwg.mxu0
        %v457 = vld [vmem:[%s370] sm:$0xff]
        %459 = vset.pattern.permute.xlu0 0
        %460 = vperm.xlu0 %459, %v457
        %v461 = vpop.permute.xlu0 %460
        %v463 = vadd.f32 %v454, %v461
        %vm464 = vcmask 31744
        %v465 = vsel %vm464, %v463, -inf
        %v466 = vrot.slane %v465, 4
        %v467 = vmax.f32 %v465, %v466
        %v468 = vrot.slane %v467, 2
        %v469 = vmax.f32 %v467, %v468
        %v470 = vrot.slane %v469, 1
        %v471 = vmax.f32 %v469, %v470
        %v472 = vsub.f32 %v463, %v471
        %v473 = vmul.f32 %v472, 1.442695
        %v474 = vpow.pop %v473
        %v475 = vsel %vm464, %v474, 0.0
        %v476 = vrot.slane %v475, 4
        %v477 = vadd.f32 %v475, %v476
        %v478 = vrot.slane %v477, 2
        %v479 = vadd.f32 %v477, %v478
        %v480 = vrot.slane %v479, 1
        %v481 = vadd.f32 %v479, %v480
        %v482 = vrcp.pop %v481
        %v483 = vmul.f32 %v474, %v482
        %v484 = vld [vmem:[%s5] sm:$0x1]
        %486 = vset.pattern.permute.xlu0 0
        %487 = vperm.xlu0 %486, %v483
        %v488 = vpop.permute.xlu0 %487
        %v490 = vmul.f32 %v488, %v371
        %v491 = vsel %vm383, %v490, 0.0
        %v492 = vrot.slane %v491, 4
        %v493 = vadd.f32 %v491, %v492
        %v494 = vrot.slane %v493, 2
        %v495 = vadd.f32 %v493, %v494
        %v496 = vrot.slane %v495, 1
        %v497 = vadd.f32 %v495, %v496
        %v498 = vld [vmem:[%s4] sm:$0xff]
        %v499 = vld [vmem:[%s4 + $0x8] sm:$0xff]
        %v500 = vld [vmem:[%s4 + $0x10] sm:$0xff]
        %v501 = vld [vmem:[%s4 + $0x18] sm:$0xff]
        %v503 = vsel %vm383, %v497, 0
        %505 = vmatprep.subr.mxu0 0.0
        %506 = vmatpush1.msra.mxu0 %v498
        %507 = vmatprep.subr.mxu0 0.0
        %508 = vmatpush1.msra.mxu0 %v499
        %509 = vmatprep.subr.mxu0 0.0
        %510 = vmatpush1.msra.mxu0 %v500
        %511 = vmatprep.subr.mxu0 0.0
        %512 = vmatpush1.msra.mxu0 %v501
        %513 = vmatprep.subr.mxu0 0.0
        %514 = vmatpush1.msra.mxu0 0.0
        %515 = vmatprep.subr.mxu0 0.0
        %516 = vmatpush1.msra.mxu0 0.0
        %517 = vmatprep.subr.mxu0 0.0
        %518 = vmatpush1.msra.mxu0 0.0
        %519 = vmatprep.subr.mxu0 0.0
        %520 = vmatpush1.msra.mxu0 0.0
        %521 = vmatprep.subr.mxu0 0.0
        %522 = vmatpush1.msra.mxu0 0.0
        %523 = vmatprep.subr.mxu0 0.0
        %524 = vmatpush1.msra.mxu0 0.0
        %525 = vmatprep.subr.mxu0 0.0
        %526 = vmatpush1.msra.mxu0 0.0
        %527 = vmatprep.subr.mxu0 0.0
        %528 = vmatpush1.msra.mxu0 0.0
        %529 = vmatprep.subr.mxu0 0.0
        %530 = vmatpush1.msra.mxu0 0.0
        %531 = vmatprep.subr.mxu0 0.0
        %532 = vmatpush1.msra.mxu0 0.0
        %533 = vmatprep.subr.mxu0 0.0
        %534 = vmatpush1.msra.mxu0 0.0
        %535 = vmatprep.subr.mxu0 0.0
        %536 = vmatpush1.msra.mxu0 0.0
        %537 = vmatprep.subr.mxu0 0.0
        %538 = vmatpush1.msra.mxu0 0.0
        %539 = vmatprep.subr.mxu0 0.0
        %540 = vmatpush1.msra.mxu0 0.0
        %541 = vmatprep.subr.mxu0 0.0
        %542 = vmatpush1.msra.mxu0 0.0
        %543 = vmatprep.subr.mxu0 0.0
        %544 = vmatpush1.msra.mxu0 0.0
        %545 = vmatprep.subr.mxu0 0.0
        %546 = vmatpush1.msra.mxu0 0.0
        %547 = vmatprep.subr.mxu0 0.0
        %548 = vmatpush1.msra.mxu0 0.0
        %549 = vmatprep.subr.mxu0 0.0
        %550 = vmatpush1.msra.mxu0 0.0
        %551 = vmatprep.subr.mxu0 0.0
        %552 = vmatpush1.msra.mxu0 0.0
        %553 = vmatprep.subr.mxu0 0.0
        %554 = vmatpush1.msra.mxu0 0.0
        %555 = vmatprep.subr.mxu0 0.0
        %556 = vmatpush1.msra.mxu0 0.0
        %557 = vmatprep.subr.mxu0 0.0
        %558 = vmatpush1.msra.mxu0 0.0
        %559 = vmatprep.subr.mxu0 0.0
        %560 = vmatpush1.msra.mxu0 0.0
        %561 = vmatprep.subr.mxu0 0.0
        %562 = vmatpush1.msra.mxu0 0.0
        %563 = vmatprep.subr.mxu0 0.0
        %564 = vmatpush1.msra.mxu0 0.0
        %565 = vmatprep.subr.mxu0 0.0
        %566 = vmatpush1.msra.mxu0 0.0
        %567 = vmatprep.subr.mxu0 0.0
        %568 = vmatpush1.msra.mxu0 0.0
        %569 = vmatprep.mubr.f32.mxu0 0.0
        %570 = vmatmul.mubr.f32.gmra.mrb[0].mxu0 %v503
        %v571 = vpop.f32.mrb[0].mxu0
        %v572 = vadd.f32 0.0, %v571
        %v573 = vpop.f32.mrb[0].mxu0
        %574 = vdwg.mxu0
        %v575 = vadd.f32 %v484, %v572
        %576 = vset.pattern.permute.xlu0 1
        %577 = vperm.xlu0 %576, %v483
        %v578 = vpop.permute.xlu0 %577
        %v580 = vmul.f32 %v578, %v371
        %v581 = vsel %vm383, %v580, 0.0
        %v582 = vrot.slane %v581, 4
        %v583 = vadd.f32 %v581, %v582
        %v584 = vrot.slane %v583, 2
        %v585 = vadd.f32 %v583, %v584
        %v586 = vrot.slane %v585, 1
        %v587 = vadd.f32 %v585, %v586
        %v588 = vld [vmem:[%s4 + $0x20] sm:$0xff]
        %v589 = vld [vmem:[%s4 + $0x28] sm:$0xff]
        %v590 = vld [vmem:[%s4 + $0x30] sm:$0xff]
        %v591 = vld [vmem:[%s4 + $0x38] sm:$0xff]
        %v593 = vsel %vm383, %v587, 0
        %595 = vmatprep.subr.mxu0 0.0
        %596 = vmatpush1.msra.mxu0 %v588
        %597 = vmatprep.subr.mxu0 0.0
        %598 = vmatpush1.msra.mxu0 %v589
        %599 = vmatprep.subr.mxu0 0.0
        %600 = vmatpush1.msra.mxu0 %v590
        %601 = vmatprep.subr.mxu0 0.0
        %602 = vmatpush1.msra.mxu0 %v591
        %603 = vmatprep.subr.mxu0 0.0
        %604 = vmatpush1.msra.mxu0 0.0
        %605 = vmatprep.subr.mxu0 0.0
        %606 = vmatpush1.msra.mxu0 0.0
        %607 = vmatprep.subr.mxu0 0.0
        %608 = vmatpush1.msra.mxu0 0.0
        %609 = vmatprep.subr.mxu0 0.0
        %610 = vmatpush1.msra.mxu0 0.0
        %611 = vmatprep.subr.mxu0 0.0
        %612 = vmatpush1.msra.mxu0 0.0
        %613 = vmatprep.subr.mxu0 0.0
        %614 = vmatpush1.msra.mxu0 0.0
        %615 = vmatprep.subr.mxu0 0.0
        %616 = vmatpush1.msra.mxu0 0.0
        %617 = vmatprep.subr.mxu0 0.0
        %618 = vmatpush1.msra.mxu0 0.0
        %619 = vmatprep.subr.mxu0 0.0
        %620 = vmatpush1.msra.mxu0 0.0
        %621 = vmatprep.subr.mxu0 0.0
        %622 = vmatpush1.msra.mxu0 0.0
        %623 = vmatprep.subr.mxu0 0.0
        %624 = vmatpush1.msra.mxu0 0.0
        %625 = vmatprep.subr.mxu0 0.0
        %626 = vmatpush1.msra.mxu0 0.0
        %627 = vmatprep.subr.mxu0 0.0
        %628 = vmatpush1.msra.mxu0 0.0
        %629 = vmatprep.subr.mxu0 0.0
        %630 = vmatpush1.msra.mxu0 0.0
        %631 = vmatprep.subr.mxu0 0.0
        %632 = vmatpush1.msra.mxu0 0.0
        %633 = vmatprep.subr.mxu0 0.0
        %634 = vmatpush1.msra.mxu0 0.0
        %635 = vmatprep.subr.mxu0 0.0
        %636 = vmatpush1.msra.mxu0 0.0
        %637 = vmatprep.subr.mxu0 0.0
        %638 = vmatpush1.msra.mxu0 0.0
        %639 = vmatprep.subr.mxu0 0.0
        %640 = vmatpush1.msra.mxu0 0.0
        %641 = vmatprep.subr.mxu0 0.0
        %642 = vmatpush1.msra.mxu0 0.0
        %643 = vmatprep.subr.mxu0 0.0
        %644 = vmatpush1.msra.mxu0 0.0
        %645 = vmatprep.subr.mxu0 0.0
        %646 = vmatpush1.msra.mxu0 0.0
        %647 = vmatprep.subr.mxu0 0.0
        %648 = vmatpush1.msra.mxu0 0.0
        %649 = vmatprep.subr.mxu0 0.0
        %650 = vmatpush1.msra.mxu0 0.0
        %651 = vmatprep.subr.mxu0 0.0
        %652 = vmatpush1.msra.mxu0 0.0
        %653 = vmatprep.subr.mxu0 0.0
        %654 = vmatpush1.msra.mxu0 0.0
        %655 = vmatprep.subr.mxu0 0.0
        %656 = vmatpush1.msra.mxu0 0.0
        %657 = vmatprep.subr.mxu0 0.0
        %658 = vmatpush1.msra.mxu0 0.0
        %659 = vmatprep.mubr.f32.mxu0 0.0
        %660 = vmatmul.mubr.f32.gmra.mrb[0].mxu0 %v593
        %v661 = vpop.f32.mrb[0].mxu0
        %v662 = vadd.f32 0.0, %v661
        %v663 = vpop.f32.mrb[0].mxu0
        %664 = vdwg.mxu0
        %v665 = vadd.f32 %v575, %v662
        %666 = vset.pattern.permute.xlu0 2
        %667 = vperm.xlu0 %666, %v483
        %v668 = vpop.permute.xlu0 %667
        %v670 = vmul.f32 %v668, %v371
        %v671 = vsel %vm383, %v670, 0.0
        %v672 = vrot.slane %v671, 4
        %v673 = vadd.f32 %v671, %v672
        %v674 = vrot.slane %v673, 2
        %v675 = vadd.f32 %v673, %v674
        %v676 = vrot.slane %v675, 1
        %v677 = vadd.f32 %v675, %v676
        %v678 = vld [vmem:[%s4 + $0x40] sm:$0xff]
        %v679 = vld [vmem:[%s4 + $0x48] sm:$0xff]
        %v680 = vld [vmem:[%s4 + $0x50] sm:$0xff]
        %v681 = vld [vmem:[%s4 + $0x58] sm:$0xff]
        %v683 = vsel %vm383, %v677, 0
        %685 = vmatprep.subr.mxu0 0.0
        %686 = vmatpush1.msra.mxu0 %v678
        %687 = vmatprep.subr.mxu0 0.0
        %688 = vmatpush1.msra.mxu0 %v679
        %689 = vmatprep.subr.mxu0 0.0
        %690 = vmatpush1.msra.mxu0 %v680
        %691 = vmatprep.subr.mxu0 0.0
        %692 = vmatpush1.msra.mxu0 %v681
        %693 = vmatprep.subr.mxu0 0.0
        %694 = vmatpush1.msra.mxu0 0.0
        %695 = vmatprep.subr.mxu0 0.0
        %696 = vmatpush1.msra.mxu0 0.0
        %697 = vmatprep.subr.mxu0 0.0
        %698 = vmatpush1.msra.mxu0 0.0
        %699 = vmatprep.subr.mxu0 0.0
        %700 = vmatpush1.msra.mxu0 0.0
        %701 = vmatprep.subr.mxu0 0.0
        %702 = vmatpush1.msra.mxu0 0.0
        %703 = vmatprep.subr.mxu0 0.0
        %704 = vmatpush1.msra.mxu0 0.0
        %705 = vmatprep.subr.mxu0 0.0
        %706 = vmatpush1.msra.mxu0 0.0
        %707 = vmatprep.subr.mxu0 0.0
        %708 = vmatpush1.msra.mxu0 0.0
        %709 = vmatprep.subr.mxu0 0.0
        %710 = vmatpush1.msra.mxu0 0.0
        %711 = vmatprep.subr.mxu0 0.0
        %712 = vmatpush1.msra.mxu0 0.0
        %713 = vmatprep.subr.mxu0 0.0
        %714 = vmatpush1.msra.mxu0 0.0
        %715 = vmatprep.subr.mxu0 0.0
        %716 = vmatpush1.msra.mxu0 0.0
        %717 = vmatprep.subr.mxu0 0.0
        %718 = vmatpush1.msra.mxu0 0.0
        %719 = vmatprep.subr.mxu0 0.0
        %720 = vmatpush1.msra.mxu0 0.0
        %721 = vmatprep.subr.mxu0 0.0
        %722 = vmatpush1.msra.mxu0 0.0
        %723 = vmatprep.subr.mxu0 0.0
        %724 = vmatpush1.msra.mxu0 0.0
        %725 = vmatprep.subr.mxu0 0.0
        %726 = vmatpush1.msra.mxu0 0.0
        %727 = vmatprep.subr.mxu0 0.0
        %728 = vmatpush1.msra.mxu0 0.0
        %729 = vmatprep.subr.mxu0 0.0
        %730 = vmatpush1.msra.mxu0 0.0
        %731 = vmatprep.subr.mxu0 0.0
        %732 = vmatpush1.msra.mxu0 0.0
        %733 = vmatprep.subr.mxu0 0.0
        %734 = vmatpush1.msra.mxu0 0.0
        %735 = vmatprep.subr.mxu0 0.0
        %736 = vmatpush1.msra.mxu0 0.0
        %737 = vmatprep.subr.mxu0 0.0
        %738 = vmatpush1.msra.mxu0 0.0
        %739 = vmatprep.subr.mxu0 0.0
        %740 = vmatpush1.msra.mxu0 0.0
        %741 = vmatprep.subr.mxu0 0.0
        %742 = vmatpush1.msra.mxu0 0.0
        %743 = vmatprep.subr.mxu0 0.0
        %744 = vmatpush1.msra.mxu0 0.0
        %745 = vmatprep.subr.mxu0 0.0
        %746 = vmatpush1.msra.mxu0 0.0
        %747 = vmatprep.subr.mxu0 0.0
        %748 = vmatpush1.msra.mxu0 0.0
        %749 = vmatprep.mubr.f32.mxu0 0.0
        %750 = vmatmul.mubr.f32.gmra.mrb[0].mxu0 %v683
        %v751 = vpop.f32.mrb[0].mxu0
        %v752 = vadd.f32 0.0, %v751
        %v753 = vpop.f32.mrb[0].mxu0
        %754 = vdwg.mxu0
        %v755 = vadd.f32 %v665, %v752
        %756 = vset.pattern.permute.xlu0 3
        %757 = vperm.xlu0 %756, %v483
        %v758 = vpop.permute.xlu0 %757
        %v760 = vmul.f32 %v758, %v371
        %v761 = vsel %vm383, %v760, 0.0
        %v762 = vrot.slane %v761, 4
        %v763 = vadd.f32 %v761, %v762
        %v764 = vrot.slane %v763, 2
        %v765 = vadd.f32 %v763, %v764
        %v766 = vrot.slane %v765, 1
        %v767 = vadd.f32 %v765, %v766
        %v768 = vld [vmem:[%s4 + $0x60] sm:$0xff]
        %v769 = vld [vmem:[%s4 + $0x68] sm:$0xff]
        %v770 = vld [vmem:[%s4 + $0x70] sm:$0xff]
        %v771 = vld [vmem:[%s4 + $0x78] sm:$0xff]
        %v773 = vsel %vm383, %v767, 0
        %775 = vmatprep.subr.mxu0 0.0
        %776 = vmatpush1.msra.mxu0 %v768
        %777 = vmatprep.subr.mxu0 0.0
        %778 = vmatpush1.msra.mxu0 %v769
        %779 = vmatprep.subr.mxu0 0.0
        %780 = vmatpush1.msra.mxu0 %v770
        %781 = vmatprep.subr.mxu0 0.0
        %782 = vmatpush1.msra.mxu0 %v771
        %783 = vmatprep.subr.mxu0 0.0
        %784 = vmatpush1.msra.mxu0 0.0
        %785 = vmatprep.subr.mxu0 0.0
        %786 = vmatpush1.msra.mxu0 0.0
        %787 = vmatprep.subr.mxu0 0.0
        %788 = vmatpush1.msra.mxu0 0.0
        %789 = vmatprep.subr.mxu0 0.0
        %790 = vmatpush1.msra.mxu0 0.0
        %791 = vmatprep.subr.mxu0 0.0
        %792 = vmatpush1.msra.mxu0 0.0
        %793 = vmatprep.subr.mxu0 0.0
        %794 = vmatpush1.msra.mxu0 0.0
        %795 = vmatprep.subr.mxu0 0.0
        %796 = vmatpush1.msra.mxu0 0.0
        %797 = vmatprep.subr.mxu0 0.0
        %798 = vmatpush1.msra.mxu0 0.0
        %799 = vmatprep.subr.mxu0 0.0
        %800 = vmatpush1.msra.mxu0 0.0
        %801 = vmatprep.subr.mxu0 0.0
        %802 = vmatpush1.msra.mxu0 0.0
        %803 = vmatprep.subr.mxu0 0.0
        %804 = vmatpush1.msra.mxu0 0.0
        %805 = vmatprep.subr.mxu0 0.0
        %806 = vmatpush1.msra.mxu0 0.0
        %807 = vmatprep.subr.mxu0 0.0
        %808 = vmatpush1.msra.mxu0 0.0
        %809 = vmatprep.subr.mxu0 0.0
        %810 = vmatpush1.msra.mxu0 0.0
        %811 = vmatprep.subr.mxu0 0.0
        %812 = vmatpush1.msra.mxu0 0.0
        %813 = vmatprep.subr.mxu0 0.0
        %814 = vmatpush1.msra.mxu0 0.0
        %815 = vmatprep.subr.mxu0 0.0
        %816 = vmatpush1.msra.mxu0 0.0
        %817 = vmatprep.subr.mxu0 0.0
        %818 = vmatpush1.msra.mxu0 0.0
        %819 = vmatprep.subr.mxu0 0.0
        %820 = vmatpush1.msra.mxu0 0.0
        %821 = vmatprep.subr.mxu0 0.0
        %822 = vmatpush1.msra.mxu0 0.0
        %823 = vmatprep.subr.mxu0 0.0
        %824 = vmatpush1.msra.mxu0 0.0
        %825 = vmatprep.subr.mxu0 0.0
        %826 = vmatpush1.msra.mxu0 0.0
        %827 = vmatprep.subr.mxu0 0.0
        %828 = vmatpush1.msra.mxu0 0.0
        %829 = vmatprep.subr.mxu0 0.0
        %830 = vmatpush1.msra.mxu0 0.0
        %831 = vmatprep.subr.mxu0 0.0
        %832 = vmatpush1.msra.mxu0 0.0
        %833 = vmatprep.subr.mxu0 0.0
        %834 = vmatpush1.msra.mxu0 0.0
        %835 = vmatprep.subr.mxu0 0.0
        %836 = vmatpush1.msra.mxu0 0.0
        %837 = vmatprep.subr.mxu0 0.0
        %838 = vmatpush1.msra.mxu0 0.0
        %839 = vmatprep.mubr.f32.mxu0 0.0
        %840 = vmatmul.mubr.f32.gmra.mrb[0].mxu0 %v773
        %v841 = vpop.f32.mrb[0].mxu0
        %v842 = vadd.f32 0.0, %v841
        %v843 = vpop.f32.mrb[0].mxu0
        %844 = vdwg.mxu0
        %v845 = vadd.f32 %v755, %v842
        %v846 = vld [vmem:[%s6] sm:$0xff]
        %v847 = vld [vmem:[%s6 + $0x8] sm:$0xff]
        %v848 = vld [vmem:[%s6 + $0x10] sm:$0xff]
        %v849 = vld [vmem:[%s6 + $0x18] sm:$0xff]
        %v850 = vld [vmem:[%s7] sm:$0x1]
        %v852 = vsel %vm383, %v845, 0
        %854 = vmatprep.subr.mxu0 0.0
        %855 = vmatpush1.msra.mxu0 %v846
        %856 = vmatprep.subr.mxu0 0.0
        %857 = vmatpush1.msra.mxu0 %v847
        %858 = vmatprep.subr.mxu0 0.0
        %859 = vmatpush1.msra.mxu0 %v848
        %860 = vmatprep.subr.mxu0 0.0
        %861 = vmatpush1.msra.mxu0 %v849
        %862 = vmatprep.subr.mxu0 0.0
        %863 = vmatpush1.msra.mxu0 0.0
        %864 = vmatprep.subr.mxu0 0.0
        %865 = vmatpush1.msra.mxu0 0.0
        %866 = vmatprep.subr.mxu0 0.0
        %867 = vmatpush1.msra.mxu0 0.0
        %868 = vmatprep.subr.mxu0 0.0
        %869 = vmatpush1.msra.mxu0 0.0
        %870 = vmatprep.subr.mxu0 0.0
        %871 = vmatpush1.msra.mxu0 0.0
        %872 = vmatprep.subr.mxu0 0.0
        %873 = vmatpush1.msra.mxu0 0.0
        %874 = vmatprep.subr.mxu0 0.0
        %875 = vmatpush1.msra.mxu0 0.0
        %876 = vmatprep.subr.mxu0 0.0
        %877 = vmatpush1.msra.mxu0 0.0
        %878 = vmatprep.subr.mxu0 0.0
        %879 = vmatpush1.msra.mxu0 0.0
        %880 = vmatprep.subr.mxu0 0.0
        %881 = vmatpush1.msra.mxu0 0.0
        %882 = vmatprep.subr.mxu0 0.0
        %883 = vmatpush1.msra.mxu0 0.0
        %884 = vmatprep.subr.mxu0 0.0
        %885 = vmatpush1.msra.mxu0 0.0
        %886 = vmatprep.subr.mxu0 0.0
        %887 = vmatpush1.msra.mxu0 0.0
        %888 = vmatprep.subr.mxu0 0.0
        %889 = vmatpush1.msra.mxu0 0.0
        %890 = vmatprep.subr.mxu0 0.0
        %891 = vmatpush1.msra.mxu0 0.0
        %892 = vmatprep.subr.mxu0 0.0
        %893 = vmatpush1.msra.mxu0 0.0
        %894 = vmatprep.subr.mxu0 0.0
        %895 = vmatpush1.msra.mxu0 0.0
        %896 = vmatprep.subr.mxu0 0.0
        %897 = vmatpush1.msra.mxu0 0.0
        %898 = vmatprep.subr.mxu0 0.0
        %899 = vmatpush1.msra.mxu0 0.0
        %900 = vmatprep.subr.mxu0 0.0
        %901 = vmatpush1.msra.mxu0 0.0
        %902 = vmatprep.subr.mxu0 0.0
        %903 = vmatpush1.msra.mxu0 0.0
        %904 = vmatprep.subr.mxu0 0.0
        %905 = vmatpush1.msra.mxu0 0.0
        %906 = vmatprep.subr.mxu0 0.0
        %907 = vmatpush1.msra.mxu0 0.0
        %908 = vmatprep.subr.mxu0 0.0
        %909 = vmatpush1.msra.mxu0 0.0
        %910 = vmatprep.subr.mxu0 0.0
        %911 = vmatpush1.msra.mxu0 0.0
        %912 = vmatprep.subr.mxu0 0.0
        %913 = vmatpush1.msra.mxu0 0.0
        %914 = vmatprep.subr.mxu0 0.0
        %915 = vmatpush1.msra.mxu0 0.0
        %916 = vmatprep.subr.mxu0 0.0
        %917 = vmatpush1.msra.mxu0 0.0
        %918 = vmatprep.mubr.f32.mxu0 0.0
        %919 = vmatmul.mubr.f32.gmra.mrb[0].mxu0 %v852
        %v920 = vpop.f32.mrb[0].mxu0
        %v921 = vadd.f32 %v850, %v920
        %v922 = vpop.f32.mrb[0].mxu0
        %923 = vdwg.mxu0
        %v924 = vmax.f32 %v921, 0.0
        %v925 = vld [vmem:[%s8] sm:$0xff]
        %v926 = vld [vmem:[%s8 + $0x8] sm:$0xff]
        %v927 = vld [vmem:[%s8 + $0x10] sm:$0xff]
        %v928 = vld [vmem:[%s8 + $0x18] sm:$0xff]
        %v929 = vld [vmem:[%s9] sm:$0x1]
        %v931 = vsel %vm383, %v924, 0
        %933 = vmatprep.subr.mxu0 0.0
        %934 = vmatpush1.msra.mxu0 %v925
        %935 = vmatprep.subr.mxu0 0.0
        %936 = vmatpush1.msra.mxu0 %v926
        %937 = vmatprep.subr.mxu0 0.0
        %938 = vmatpush1.msra.mxu0 %v927
        %939 = vmatprep.subr.mxu0 0.0
        %940 = vmatpush1.msra.mxu0 %v928
        %941 = vmatprep.subr.mxu0 0.0
        %942 = vmatpush1.msra.mxu0 0.0
        %943 = vmatprep.subr.mxu0 0.0
        %944 = vmatpush1.msra.mxu0 0.0
        %945 = vmatprep.subr.mxu0 0.0
        %946 = vmatpush1.msra.mxu0 0.0
        %947 = vmatprep.subr.mxu0 0.0
        %948 = vmatpush1.msra.mxu0 0.0
        %949 = vmatprep.subr.mxu0 0.0
        %950 = vmatpush1.msra.mxu0 0.0
        %951 = vmatprep.subr.mxu0 0.0
        %952 = vmatpush1.msra.mxu0 0.0
        %953 = vmatprep.subr.mxu0 0.0
        %954 = vmatpush1.msra.mxu0 0.0
        %955 = vmatprep.subr.mxu0 0.0
        %956 = vmatpush1.msra.mxu0 0.0
        %957 = vmatprep.subr.mxu0 0.0
        %958 = vmatpush1.msra.mxu0 0.0
        %959 = vmatprep.subr.mxu0 0.0
        %960 = vmatpush1.msra.mxu0 0.0
        %961 = vmatprep.subr.mxu0 0.0
        %962 = vmatpush1.msra.mxu0 0.0
        %963 = vmatprep.subr.mxu0 0.0
        %964 = vmatpush1.msra.mxu0 0.0
        %965 = vmatprep.subr.mxu0 0.0
        %966 = vmatpush1.msra.mxu0 0.0
        %967 = vmatprep.subr.mxu0 0.0
        %968 = vmatpush1.msra.mxu0 0.0
        %969 = vmatprep.subr.mxu0 0.0
        %970 = vmatpush1.msra.mxu0 0.0
        %971 = vmatprep.subr.mxu0 0.0
        %972 = vmatpush1.msra.mxu0 0.0
        %973 = vmatprep.subr.mxu0 0.0
        %974 = vmatpush1.msra.mxu0 0.0
        %975 = vmatprep.subr.mxu0 0.0
        %976 = vmatpush1.msra.mxu0 0.0
        %977 = vmatprep.subr.mxu0 0.0
        %978 = vmatpush1.msra.mxu0 0.0
        %979 = vmatprep.subr.mxu0 0.0
        %980 = vmatpush1.msra.mxu0 0.0
        %981 = vmatprep.subr.mxu0 0.0
        %982 = vmatpush1.msra.mxu0 0.0
        %983 = vmatprep.subr.mxu0 0.0
        %984 = vmatpush1.msra.mxu0 0.0
        %985 = vmatprep.subr.mxu0 0.0
        %986 = vmatpush1.msra.mxu0 0.0
        %987 = vmatprep.subr.mxu0 0.0
        %988 = vmatpush1.msra.mxu0 0.0
        %989 = vmatprep.subr.mxu0 0.0
        %990 = vmatpush1.msra.mxu0 0.0
        %991 = vmatprep.subr.mxu0 0.0
        %992 = vmatpush1.msra.mxu0 0.0
        %993 = vmatprep.subr.mxu0 0.0
        %994 = vmatpush1.msra.mxu0 0.0
        %995 = vmatprep.subr.mxu0 0.0
        %996 = vmatpush1.msra.mxu0 0.0
        %997 = vmatprep.mubr.f32.mxu0 0.0
        %998 = vmatmul.mubr.f32.gmra.mrb[0].mxu0 %v931
        %v999 = vpop.f32.mrb[0].mxu0
        %v1000 = vadd.f32 %v929, %v999
        %v1001 = vpop.f32.mrb[0].mxu0
        %1002 = vdwg.mxu0
        %1003 = vst [vmem:[%s362] sm:$0x1] %v1000
        %s1004 = sand.u32 %s252, 1
        %s1005 = scalar_lea.sflag [#allocation3], %s1004
        %s1006 = sand.u32 %s252, 1
        %s1007 = scalar_lea.vmem [#allocation2], %s1006
        // Predicated region
        $region61: #{tpu_custom_call.1} parent=59 // pred_check
          %p1008 = pneg %p262
        $region62: #{tpu_custom_call.1} parent=59 // pred_check_branch
          %1010 = sbr.rel (%p1008) target = $region64
        $region63: #{tpu_custom_call.1} parent=59 // pred_region
          %s1012 = ssub.s32 16, 16
          %1013 = vsyncadd %s1005, %s1012
          %s1014 = smul.addr %s24, 16
          %s1015 = scalar_lea.hbm %s10, %s1014
          %s1017 = sshll.u32 %s1007, 4
          %s1018 = int_to_ptr.vmem [resolvable:$true] %s1017
          %1020 = dma.vmem_to_hbm [thread:$0]  %s1018, 16, %s1015, %s1005
        $region64: #{tpu_custom_call.1} parent=59 // pred_fallthru
          _
      $region60: #{tpu_custom_call.1} parent=5 // pred_fallthru
        _
      %p1021 = scmp.le.s32.totalorder 2, %s19
      // Predicated region
      $region65: #{tpu_custom_call.1} parent=5 // pred_check
        %p1022 = pneg %p1021
      $region66: #{tpu_custom_call.1} parent=5 // pred_check_branch
        %1024 = sbr.rel (%p1022) target = $region68
      $region67: #{tpu_custom_call.1} parent=5 // pred_region
        %s1025 = ssub.s32 %s19, 2
        // Predicated region
        $region69: #{tpu_custom_call.1} parent=67 // pred_check
          %p1026 = pneg %p268
        $region70: #{tpu_custom_call.1} parent=67 // pred_check_branch
          %1028 = sbr.rel (%p1026) target = $region72
        $region71: #{tpu_custom_call.1} parent=67 // pred_region
          %s1029 = sand.u32 %s253, 1
          %s1030 = scalar_lea.sflag [#allocation3], %s1029
          %s1031 = sand.u32 %s253, 1
          %s1032 = scalar_lea.vmem [#allocation2], %s1031
          %1033 = dma.done %s1030, 16
        $region72: #{tpu_custom_call.1} parent=67 // pred_fallthru
          _
      $region68: #{tpu_custom_call.1} parent=5 // pred_fallthru
        _
    $region6: #{tpu_custom_call.1} parent=1 // loop_footer
      %s23 = sadd.s32 1, %s19
    $region7: #{tpu_custom_call.1} parent=1 // loop_footer_branch
      %18 = sbr.rel target = $region3
    $region8: #{tpu_custom_call.1} parent=1 // loop_exit
      _
    %1034 = vsyncpa [#allocation3], 1
    %s1035 = scalar_lea.sflag [#allocation3], 1
    %1036 = vsyncpa %s1035, 1

</llo_original>
